<compile_context>
chip_gen: v7x
topology: tpu7x:2x2x1
jax: 0.10.0
libtpu: 0.0.40
codegen_flags: <defaults>
</compile_context>

<pallas_src>
import jax
import jax.numpy as jnp
from jax import lax
from jax.experimental import pallas as pl
from jax.experimental.pallas import tpu as pltpu

BN_EPS = 1e-5


# ---------------- fused Pallas kernel (GNN layer + readout head) ----------------

def gcn_fused_kernel(x_ref, xw_ref, ea_ref, grow_ref, gcolT_ref, ew_ref,
                     wme_ref, wax_ref, waa_ref, ba_ref,
                     pool_ref, w1_ref, b1_ref, w2_ref, b2_ref,
                     out_ref, aggr_ref):
    e = pl.program_id(0)

    @pl.when(e == 0)
    def _():
        aggr_ref[...] = jnp.zeros_like(aggr_ref)

    # message: edge_weight * relu(W_msg @ [x_j, edge_attr])
    #   x_j @ Wx is reassociated as g_row @ (x @ Wx + b_msg); xw is precomputed
    #   in the wrapper (b_msg folded in, padded edges have all-zero one-hot rows
    #   and ew = 0 so they contribute nothing).
    msg = (jnp.dot(grow_ref[...], xw_ref[...], preferred_element_type=jnp.float32)
           + jnp.dot(ea_ref[...], wme_ref[...], preferred_element_type=jnp.float32))
    msg = ew_ref[...] * jnp.maximum(msg, 0.0)                      # (TE, Dmsg) f32

    # scatter-add by target node: natural-layout MXU matmul (N, TE) @ (TE, Dmsg)
    aggr_ref[...] += jnp.dot(gcolT_ref[...], msg.astype(jnp.bfloat16),
                             preferred_element_type=jnp.float32)   # (N, Dmsg) f32

    @pl.when(e == pl.num_programs(0) - 1)
    def _():
        # node update: relu(W_apply @ [x, aggr])
        h = (jnp.dot(x_ref[...], wax_ref[...], preferred_element_type=jnp.float32)
             + jnp.dot(aggr_ref[...].astype(jnp.bfloat16), waa_ref[...],
                       preferred_element_type=jnp.float32)
             + ba_ref[...])
        h = jnp.maximum(h, 0.0)                                    # (N, H) f32

        # readout: global_mean_pool (1/count folded into pool matrix)
        #          -> BatchNorm1d (folded into W1'/b1') -> relu(Linear) -> Linear
        # TODO(synk): BatchNorm1d implemented with running stats (eval mode); a
        # freshly-constructed torch module in train() mode would use batch stats.
        gf = jnp.dot(pool_ref[...], h.astype(jnp.bfloat16),
                     preferred_element_type=jnp.float32)           # (B, H) f32
        z = jnp.maximum(
            jnp.dot(gf.astype(jnp.bfloat16), w1_ref[...],
                    preferred_element_type=jnp.float32) + b1_ref[...], 0.0)
        out_ref[...] = (jnp.dot(z.astype(jnp.bfloat16), w2_ref[...],
                                preferred_element_type=jnp.float32) + b2_ref[...])


# ---------------- glue / wrapper ----------------

def gcn_forward(x, edge_index, edge_attr, batch, params, num_graphs, *, edge_tile=512):
    n, dn = x.shape
    de = edge_attr.shape[1]
    hidden = params["W_apply"].shape[0]
    pred_hidden = params["W1"].shape[0]
    n_tasks = params["W2"].shape[0]
    dmsg = params["W_msg"].shape[0]          # W_msg outputs node_dims

    # add_self_loops(fill_value='mean'): loop attr = scatter-mean of edge_attr by target
    row, col = edge_index[0], edge_index[1]
    ones_e = jnp.ones((edge_attr.shape[0],), jnp.float32)
    in_cnt = jax.ops.segment_sum(ones_e, col, num_segments=n)
    attr_sum = jax.ops.segment_sum(edge_attr, col, num_segments=n)
    loop_attr = jnp.where(in_cnt[:, None] > 0,
                          attr_sum / jnp.maximum(in_cnt[:, None], 1.0), 0.0)
    loop_idx = jnp.arange(n, dtype=edge_index.dtype)
    row_f = jnp.concatenate([row, loop_idx])
    col_f = jnp.concatenate([col, loop_idx])
    ea_f = jnp.concatenate([edge_attr, loop_attr], axis=0)
    e = int(row_f.shape[0])

    # GCN symmetric normalization: done here (trivial gathers), passed as (E',1)
    deg = jax.ops.segment_sum(jnp.ones((e,), jnp.float32), col_f, num_segments=n)
    norm = jnp.where(deg > 0, deg ** -0.5, 0.0)
    ew = (norm[row_f] * norm[col_f])[:, None]                      # (E', 1) f32

    # adaptive edge tile: a single grid step for small graphs (kills per-step
    # overhead); multi-tile graphs use a 128-multiple tile so the lane-tiled
    # transposed scatter matrix satisfies the (8,128) block constraint.
    e16 = -(-e // 16) * 16
    if e16 <= edge_tile:
        te = e16
    else:
        te = -(-edge_tile // 128) * 128
    e_pad = -(-e // te) * te
    pad = e_pad - e
    if pad:
        row_f = jnp.concatenate([row_f, jnp.full((pad,), n, row_f.dtype)])
        col_f = jnp.concatenate([col_f, jnp.full((pad,), n, col_f.dtype)])
        ea_f = jnp.concatenate([ea_f, jnp.zeros((pad, de), ea_f.dtype)])
        ew = jnp.concatenate([ew, jnp.zeros((pad, 1), ew.dtype)])

    bf = jnp.bfloat16
    g_row = jax.nn.one_hot(row_f, n, dtype=bf)                     # (E_pad, N) exact in bf16
    # pre-transposed scatter matrix (N, E_pad): padded edges (index n) -> zero cols
    g_colT = (col_f[None, :] == jnp.arange(n, dtype=col_f.dtype)[:, None]).astype(bf)
    pool = jax.nn.one_hot(batch, num_graphs, dtype=jnp.float32).T  # (B, N)
    inv_cnt = 1.0 / jnp.maximum(jnp.sum(pool, axis=1, keepdims=True), 1.0)
    pool_mean = (pool * inv_cnt).astype(bf)                        # mean-pool matrix

    # split/transpose PyTorch (out,in) weights; reassociate x_j@Wx -> g_row@(x@Wx+b);
    # fold BN (running stats) into predict1 weights/bias.
    wmx = params["W_msg"][:, :dn].T
    wme = params["W_msg"][:, dn:].T
    xw = x @ wmx + params["b_msg"][None, :]                        # (N, Dmsg) f32
    wax = params["W_apply"][:, :dn].T
    waa = params["W_apply"][:, dn:].T
    bn_scale = params["bn_gamma"] * lax.rsqrt(params["bn_var"] + BN_EPS)
    bn_shift = params["bn_beta"] - params["bn_mean"] * bn_scale
    w1p = bn_scale[:, None] * params["W1"].T                       # (H, Ph) f32
    b1p = params["b1"] + bn_shift @ params["W1"].T                 # (Ph,)  f32

    def full(s0, s1):
        return pl.BlockSpec((s0, s1), lambda i: (0, 0))

    grid_spec = pltpu.PrefetchScalarGridSpec(
        num_scalar_prefetch=0,
        grid=(e_pad // te,),
        in_specs=[
            full(n, dn),                               # x (bf16)
            full(n, dmsg),                             # xw = x@Wx + b_msg (bf16)
            pl.BlockSpec((te, de), lambda i: (i, 0)),  # ea (bf16)
            pl.BlockSpec((te, n), lambda i: (i, 0)),   # g_row (bf16)
            pl.BlockSpec((n, te), lambda i: (0, i)),   # g_colT (bf16)
            pl.BlockSpec((te, 1), lambda i: (i, 0)),   # ew (f32)
            full(de, dmsg),                            # wme (bf16)
            full(dn, hidden),                          # wax (bf16)
            full(dmsg, hidden),                        # waa (bf16)
            full(1, hidden),                           # b_apply (f32)
            full(num_graphs, n),                       # pool_mean (bf16)
            full(hidden, pred_hidden),                 # W1' = bn_scale*W1.T (bf16)
            full(1, pred_hidden),                      # b1' (f32)
            full(pred_hidden, n_tasks),                # W2.T (bf16)
            full(1, n_tasks),                          # b2 (f32)
        ],
        out_specs=pl.BlockSpec((num_graphs, n_tasks), lambda i: (0, 0)),
        scratch_shapes=[pltpu.VMEM((n, dmsg), jnp.float32)],
    )

    out = pl.pallas_call(
        gcn_fused_kernel,
        out_shape=jax.ShapeDtypeStruct((num_graphs, n_tasks), jnp.float32),
        grid_spec=grid_spec,
        compiler_params=pltpu.CompilerParams(
            dimension_semantics=("arbitrary",),
            vmem_limit_bytes=32 * 1024 * 1024),
    )(x.astype(bf), xw.astype(bf), ea_f.astype(bf), g_row, g_colT, ew,
      wme.astype(bf), wax.astype(bf), waa.astype(bf), params["b_apply"][None, :],
      pool_mean, w1p.astype(bf), b1p[None, :],
      params["W2"].T.astype(bf), params["b2"][None, :])
    return out


# ---------------- pure-JAX f32 reference for verification ----------------

def gcn_reference(x, edge_index, edge_attr, batch, params, num_graphs):
    n, _ = x.shape
    row, col = edge_index[0], edge_index[1]
    ones_e = jnp.ones((edge_attr.shape[0],), jnp.float32)
    in_cnt = jax.ops.segment_sum(ones_e, col, num_segments=n)
    attr_sum = jax.ops.segment_sum(edge_attr, col, num_segments=n)
    loop_attr = jnp.where(in_cnt[:, None] > 0,
                          attr_sum / jnp.maximum(in_cnt[:, None], 1.0), 0.0)
    loop_idx = jnp.arange(n, dtype=edge_index.dtype)
    row_f = jnp.concatenate([row, loop_idx])
    col_f = jnp.concatenate([col, loop_idx])
    ea_f = jnp.concatenate([edge_attr, loop_attr], axis=0)

    deg = jax.ops.segment_sum(jnp.ones_like(row_f, jnp.float32), col_f, num_segments=n)
    norm = jnp.where(deg > 0, deg ** -0.5, 0.0)
    ew = norm[row_f] * norm[col_f]
    msg_in = jnp.concatenate([x[row_f], ea_f], axis=1)
    msg = ew[:, None] * jax.nn.relu(msg_in @ params["W_msg"].T + params["b_msg"])
    aggr = jax.ops.segment_sum(msg, col_f, num_segments=n)
    h = jax.nn.relu(jnp.concatenate([x, aggr], axis=1) @ params["W_apply"].T
                    + params["b_apply"])

    cnt = jax.ops.segment_sum(jnp.ones((n,), jnp.float32), batch, num_segments=num_graphs)
    gf = jax.ops.segment_sum(h, batch, num_segments=num_graphs) / jnp.maximum(cnt, 1.0)[:, None]
    bn = ((gf - params["bn_mean"]) / jnp.sqrt(params["bn_var"] + BN_EPS)
          * params["bn_gamma"] + params["bn_beta"])
    z = jax.nn.relu(bn @ params["W1"].T + params["b1"])
    return z @ params["W2"].T + params["b2"]


if __name__ == "__main__":
    node_feats, edge_feats = 8, 4
    hidden1, pred_hidden, n_tasks = 32, 16, 1
    n_per_graph, num_graphs = 8, 2
    n = n_per_graph * num_graphs

    # deterministic bidirectional ring inside each of the two graphs -> 32 edges
    src, dst = [], []
    for g in range(num_graphs):
        off = g * n_per_graph
        for i in range(n_per_graph):
            a, b = off + i, off + (i + 1) % n_per_graph
            src += [a, b]
            dst += [b, a]
    edge_index = jnp.array([src, dst], dtype=jnp.int32)       # (2, 32)
    num_edges = edge_index.shape[1]
    batch = jnp.repeat(jnp.arange(num_graphs, dtype=jnp.int32), n_per_graph)

    key = jax.random.PRNGKey(0)
    ks = jax.random.split(key, 8)
    x = jax.random.normal(ks[0], (n, node_feats), jnp.float32)
    edge_attr = jax.random.normal(ks[1], (num_edges, edge_feats), jnp.float32)

    def init_linear(k, out_d, in_d):
        kw, kb = jax.random.split(k)
        lim = 1.0 / (in_d ** 0.5)
        return (jax.random.uniform(kw, (out_d, in_d), jnp.float32, -lim, lim),
                jax.random.uniform(kb, (out_d,), jnp.float32, -lim, lim))

    W_msg, b_msg = init_linear(ks[2], node_feats, node_feats + edge_feats)
    W_apply, b_apply = init_linear(ks[3], hidden1, 2 * node_feats)
    W1, b1 = init_linear(ks[4], pred_hidden, hidden1)
    W2, b2 = init_linear(ks[5], n_tasks, pred_hidden)
    params = dict(
        W_msg=W_msg, b_msg=b_msg, W_apply=W_apply, b_apply=b_apply,
        bn_gamma=jnp.ones((hidden1,), jnp.float32),
        bn_beta=jnp.zeros((hidden1,), jnp.float32),
        bn_mean=jnp.zeros((hidden1,), jnp.float32),
        bn_var=jnp.ones((hidden1,), jnp.float32),
        W1=W1, b1=b1, W2=W2, b2=b2)
    # NOTE: self.conv2 is constructed in GCN.__init__ but never used in forward,
    # so its parameters are intentionally not materialized.

    out = jax.block_until_ready(
        gcn_forward(x, edge_index, edge_attr, batch, params, num_graphs))
    ref = gcn_reference(x, edge_index, edge_attr, batch, params, num_graphs)
    assert out.shape == (num_graphs, n_tasks)
    # tolerance loosened vs the pure-f32 version: activations/weights feeding the
    # MXU are bf16 (one-hots stay exact), accumulation is f32.
    assert jnp.allclose(out, ref, atol=3e-2, rtol=3e-2), (out, ref)
    print("KERNEL_OK")
</pallas_src>

<mosaic_0001>
module attributes {stable_mosaic.version = 11 : i64} {
  func.func @gcn_fused_kernel(%arg0: i32, %arg1: memref<16x8xbf16, #tpu.memory_space<vmem>>, %arg2: memref<16x8xbf16, #tpu.memory_space<vmem>>, %arg3: memref<48x4xbf16, #tpu.memory_space<vmem>>, %arg4: memref<48x16xbf16, #tpu.memory_space<vmem>>, %arg5: memref<16x48xbf16, #tpu.memory_space<vmem>>, %arg6: memref<48x1xf32, #tpu.memory_space<vmem>>, %arg7: memref<4x8xbf16, #tpu.memory_space<vmem>>, %arg8: memref<8x32xbf16, #tpu.memory_space<vmem>>, %arg9: memref<8x32xbf16, #tpu.memory_space<vmem>>, %arg10: memref<1x32xf32, #tpu.memory_space<vmem>>, %arg11: memref<2x16xbf16, #tpu.memory_space<vmem>>, %arg12: memref<32x16xbf16, #tpu.memory_space<vmem>>, %arg13: memref<1x16xf32, #tpu.memory_space<vmem>>, %arg14: memref<16x1xbf16, #tpu.memory_space<vmem>>, %arg15: memref<1x1xf32, #tpu.memory_space<vmem>>, %arg16: memref<2x1xf32, #tpu.memory_space<vmem>>, %arg17: memref<16x8xf32, #tpu.memory_space<vmem>>) attributes {dimension_semantics = [#tpu.dimension_semantics<arbitrary>], iteration_bounds = array<i64: 1>, scalar_prefetch = 0 : i64, scratch_operands = 1 : i64, tpu.core_type = #tpu.core_type<tc>, window_params = [{pipeline_mode = #tpu.pipeline_mode<synchronous>, transform_indices = @transform_0, window_bounds = array<i64: 16, 8>}, {pipeline_mode = #tpu.pipeline_mode<synchronous>, transform_indices = @transform_1, window_bounds = array<i64: 16, 8>}, {transform_indices = @transform_2, window_bounds = array<i64: 48, 4>}, {transform_indices = @transform_3, window_bounds = array<i64: 48, 16>}, {transform_indices = @transform_4, window_bounds = array<i64: 16, 48>}, {transform_indices = @transform_5, window_bounds = array<i64: 48, 1>}, {pipeline_mode = #tpu.pipeline_mode<synchronous>, transform_indices = @transform_6, window_bounds = array<i64: 4, 8>}, {pipeline_mode = #tpu.pipeline_mode<synchronous>, transform_indices = @transform_7, window_bounds = array<i64: 8, 32>}, {pipeline_mode = #tpu.pipeline_mode<synchronous>, transform_indices = @transform_8, window_bounds = array<i64: 8, 32>}, {pipeline_mode = #tpu.pipeline_mode<synchronous>, transform_indices = @transform_9, window_bounds = array<i64: 1, 32>}, {pipeline_mode = #tpu.pipeline_mode<synchronous>, transform_indices = @transform_10, window_bounds = array<i64: 2, 16>}, {pipeline_mode = #tpu.pipeline_mode<synchronous>, transform_indices = @transform_11, window_bounds = array<i64: 32, 16>}, {pipeline_mode = #tpu.pipeline_mode<synchronous>, transform_indices = @transform_12, window_bounds = array<i64: 1, 16>}, {pipeline_mode = #tpu.pipeline_mode<synchronous>, transform_indices = @transform_13, window_bounds = array<i64: 16, 1>}, {pipeline_mode = #tpu.pipeline_mode<synchronous>, transform_indices = @transform_14, window_bounds = array<i64: 1, 1>}, {pipeline_mode = #tpu.pipeline_mode<synchronous>, transform_indices = @transform_15, window_bounds = array<i64: 2, 1>}]} {
    %c0_i32 = arith.constant 0 : i32
    %0 = arith.cmpi eq, %arg0, %c0_i32 : i32
    %1 = arith.extui %0 : i1 to i32
    %c0_i32_0 = arith.constant 0 : i32
    %2 = arith.cmpi ne, %1, %c0_i32_0 : i32
    scf.if %2 {
      %cst_21 = arith.constant 0.000000e+00 : f32
      %24 = vector.broadcast %cst_21 : f32 to vector<16x8xf32>
      %c0_22 = arith.constant 0 : index
      %c0_23 = arith.constant 0 : index
      %25 = vector.load %arg17[%c0_22, %c0_23] : memref<16x8xf32, #tpu.memory_space<vmem>>, vector<16x8xf32>
      tpu.vector_store %arg17[%c0_22, %c0_23], %24 {strides = array<i32>} : memref<16x8xf32, #tpu.memory_space<vmem>>, vector<16x8xf32>,
    } else {
    }
    %c0 = arith.constant 0 : index
    %c0_1 = arith.constant 0 : index
    %3 = vector.load %arg4[%c0, %c0_1] : memref<48x16xbf16, #tpu.memory_space<vmem>>, vector<48x16xbf16>
    %c0_2 = arith.constant 0 : index
    %c0_3 = arith.constant 0 : index
    %4 = vector.load %arg2[%c0_2, %c0_3] : memref<16x8xbf16, #tpu.memory_space<vmem>>, vector<16x8xbf16>
    %cst = arith.constant dense<0.000000e+00> : vector<48x8xf32>
    %5 = tpu.matmul %3, %4, %cst {dimension_numbers = #tpu.dot_dimension_numbers<[1], [0], [0], [1], [0, 0, 1, 1], [], []>} : vector<48x16xbf16>, vector<16x8xbf16>, vector<48x8xf32> -> vector<48x8xf32>
    %c0_4 = arith.constant 0 : index
    %c0_5 = arith.constant 0 : index
    %6 = vector.load %arg3[%c0_4, %c0_5] : memref<48x4xbf16, #tpu.memory_space<vmem>>, vector<48x4xbf16>
    %c0_6 = arith.constant 0 : index
    %c0_7 = arith.constant 0 : index
    %7 = vector.load %arg7[%c0_6, %c0_7] : memref<4x8xbf16, #tpu.memory_space<vmem>>, vector<4x8xbf16>
    %cst_8 = arith.constant dense<0.000000e+00> : vector<48x8xf32>
    %8 = tpu.matmul %6, %7, %cst_8 {dimension_numbers = #tpu.dot_dimension_numbers<[1], [0], [0], [1], [0, 0, 1, 1], [], []>} : vector<48x4xbf16>, vector<4x8xbf16>, vector<48x8xf32> -> vector<48x8xf32>
    %9 = arith.addf %5, %8 : vector<48x8xf32>
    %c0_9 = arith.constant 0 : index
    %c0_10 = arith.constant 0 : index
    %10 = vector.load %arg6[%c0_9, %c0_10] : memref<48x1xf32, #tpu.memory_space<vmem>>, vector<48x1xf32>
    %cst_11 = arith.constant 0.000000e+00 : f32
    %11 = vector.broadcast %cst_11 : f32 to vector<48x8xf32>
    %12 = arith.maximumf %9, %11 : vector<48x8xf32>
    %13 = vector.broadcast %10 : vector<48x1xf32> to vector<48x8xf32>
    %14 = arith.mulf %13, %12 : vector<48x8xf32>
    %c0_12 = arith.constant 0 : index
    %c0_13 = arith.constant 0 : index
    %15 = vector.load %arg17[%c0_12, %c0_13] : memref<16x8xf32, #tpu.memory_space<vmem>>, vector<16x8xf32>
    %c0_14 = arith.constant 0 : index
    %c0_15 = arith.constant 0 : index
    %16 = vector.load %arg5[%c0_14, %c0_15] : memref<16x48xbf16, #tpu.memory_space<vmem>>, vector<16x48xbf16>
    %17 = arith.truncf %14 : vector<48x8xf32> to vector<48x8xbf16>
    %cst_16 = arith.constant dense<0.000000e+00> : vector<16x8xf32>
    %18 = tpu.matmul %16, %17, %cst_16 {dimension_numbers = #tpu.dot_dimension_numbers<[1], [0], [0], [1], [0, 0, 1, 1], [], []>} : vector<16x48xbf16>, vector<48x8xbf16>, vector<16x8xf32> -> vector<16x8xf32>
    %19 = arith.addf %15, %18 : vector<16x8xf32>
    %c0_17 = arith.constant 0 : index
    %c0_18 = arith.constant 0 : index
    %20 = vector.load %arg17[%c0_17, %c0_18] : memref<16x8xf32, #tpu.memory_space<vmem>>, vector<16x8xf32>
    tpu.vector_store %arg17[%c0_17, %c0_18], %19 {strides = array<i32>} : memref<16x8xf32, #tpu.memory_space<vmem>>, vector<16x8xf32>,
    %c0_i32_19 = arith.constant 0 : i32
    %21 = arith.cmpi eq, %arg0, %c0_i32_19 : i32
    %22 = arith.extui %21 : i1 to i32
    %c0_i32_20 = arith.constant 0 : i32
    %23 = arith.cmpi ne, %22, %c0_i32_20 : i32
    scf.if %23 {
      %c0_21 = arith.constant 0 : index
      %c0_22 = arith.constant 0 : index
      %24 = vector.load %arg1[%c0_21, %c0_22] : memref<16x8xbf16, #tpu.memory_space<vmem>>, vector<16x8xbf16>
      %c0_23 = arith.constant 0 : index
      %c0_24 = arith.constant 0 : index
      %25 = vector.load %arg8[%c0_23, %c0_24] : memref<8x32xbf16, #tpu.memory_space<vmem>>, vector<8x32xbf16>
      %cst_25 = arith.constant dense<0.000000e+00> : vector<16x32xf32>
      %26 = tpu.matmul %24, %25, %cst_25 {dimension_numbers = #tpu.dot_dimension_numbers<[1], [0], [0], [1], [0, 0, 1, 1], [], []>} : vector<16x8xbf16>, vector<8x32xbf16>, vector<16x32xf32> -> vector<16x32xf32>
      %c0_26 = arith.constant 0 : index
      %c0_27 = arith.constant 0 : index
      %27 = vector.load %arg17[%c0_26, %c0_27] : memref<16x8xf32, #tpu.memory_space<vmem>>, vector<16x8xf32>
      %28 = arith.truncf %27 : vector<16x8xf32> to vector<16x8xbf16>
      %c0_28 = arith.constant 0 : index
      %c0_29 = arith.constant 0 : index
      %29 = vector.load %arg9[%c0_28, %c0_29] : memref<8x32xbf16, #tpu.memory_space<vmem>>, vector<8x32xbf16>
      %cst_30 = arith.constant dense<0.000000e+00> : vector<16x32xf32>
      %30 = tpu.matmul %28, %29, %cst_30 {dimension_numbers = #tpu.dot_dimension_numbers<[1], [0], [0], [1], [0, 0, 1, 1], [], []>} : vector<16x8xbf16>, vector<8x32xbf16>, vector<16x32xf32> -> vector<16x32xf32>
      %31 = arith.addf %26, %30 : vector<16x32xf32>
      %c0_31 = arith.constant 0 : index
      %c0_32 = arith.constant 0 : index
      %32 = vector.load %arg10[%c0_31, %c0_32] : memref<1x32xf32, #tpu.memory_space<vmem>>, vector<1x32xf32>
      %33 = vector.broadcast %32 : vector<1x32xf32> to vector<16x32xf32>
      %34 = arith.addf %31, %33 : vector<16x32xf32>
      %cst_33 = arith.constant 0.000000e+00 : f32
      %35 = vector.broadcast %cst_33 : f32 to vector<16x32xf32>
      %36 = arith.maximumf %34, %35 : vector<16x32xf32>
      %c0_34 = arith.constant 0 : index
      %c0_35 = arith.constant 0 : index
      %37 = vector.load %arg11[%c0_34, %c0_35] : memref<2x16xbf16, #tpu.memory_space<vmem>>, vector<2x16xbf16>
      %38 = arith.truncf %36 : vector<16x32xf32> to vector<16x32xbf16>
      %cst_36 = arith.constant dense<0.000000e+00> : vector<2x32xf32>
      %39 = tpu.matmul %37, %38, %cst_36 {dimension_numbers = #tpu.dot_dimension_numbers<[1], [0], [0], [1], [0, 0, 1, 1], [], []>} : vector<2x16xbf16>, vector<16x32xbf16>, vector<2x32xf32> -> vector<2x32xf32>
      %40 = arith.truncf %39 : vector<2x32xf32> to vector<2x32xbf16>
      %c0_37 = arith.constant 0 : index
      %c0_38 = arith.constant 0 : index
      %41 = vector.load %arg12[%c0_37, %c0_38] : memref<32x16xbf16, #tpu.memory_space<vmem>>, vector<32x16xbf16>
      %cst_39 = arith.constant dense<0.000000e+00> : vector<2x16xf32>
      %42 = tpu.matmul %40, %41, %cst_39 {dimension_numbers = #tpu.dot_dimension_numbers<[1], [0], [0], [1], [0, 0, 1, 1], [], []>} : vector<2x32xbf16>, vector<32x16xbf16>, vector<2x16xf32> -> vector<2x16xf32>
      %c0_40 = arith.constant 0 : index
      %c0_41 = arith.constant 0 : index
      %43 = vector.load %arg13[%c0_40, %c0_41] : memref<1x16xf32, #tpu.memory_space<vmem>>, vector<1x16xf32>
      %44 = vector.broadcast %43 : vector<1x16xf32> to vector<2x16xf32>
      %45 = arith.addf %42, %44 : vector<2x16xf32>
      %cst_42 = arith.constant 0.000000e+00 : f32
      %46 = vector.broadcast %cst_42 : f32 to vector<2x16xf32>
      %47 = arith.maximumf %45, %46 : vector<2x16xf32>
      %48 = arith.truncf %47 : vector<2x16xf32> to vector<2x16xbf16>
      %c0_43 = arith.constant 0 : index
      %c0_44 = arith.constant 0 : index
      %49 = vector.load %arg14[%c0_43, %c0_44] : memref<16x1xbf16, #tpu.memory_space<vmem>>, vector<16x1xbf16>
      %cst_45 = arith.constant dense<0.000000e+00> : vector<2x1xf32>
      %50 = tpu.matmul %48, %49, %cst_45 {dimension_numbers = #tpu.dot_dimension_numbers<[1], [0], [0], [1], [0, 0, 1, 1], [], []>} : vector<2x16xbf16>, vector<16x1xbf16>, vector<2x1xf32> -> vector<2x1xf32>
      %c0_46 = arith.constant 0 : index
      %c0_47 = arith.constant 0 : index
      %51 = vector.load %arg15[%c0_46, %c0_47] : memref<1x1xf32, #tpu.memory_space<vmem>>, vector<1x1xf32>
      %52 = vector.broadcast %51 : vector<1x1xf32> to vector<2x1xf32>
      %53 = arith.addf %50, %52 : vector<2x1xf32>
      %c0_48 = arith.constant 0 : index
      %c0_49 = arith.constant 0 : index
      %54 = vector.load %arg16[%c0_48, %c0_49] : memref<2x1xf32, #tpu.memory_space<vmem>>, vector<2x1xf32>
      tpu.vector_store %arg16[%c0_48, %c0_49], %53 {strides = array<i32>} : memref<2x1xf32, #tpu.memory_space<vmem>>, vector<2x1xf32>,
    } else {
    }
    return
  }
  func.func @transform_0(%arg0: i32) -> (i32, i32) {
    %c0_i32 = arith.constant 0 : i32
    %c0_i32_0 = arith.constant 0 : i32
    %c0_i32_1 = arith.constant 0 : i32
    return %c0_i32, %c0_i32_0 : i32, i32
  }
  func.func @transform_1(%arg0: i32) -> (i32, i32) {
    %c0_i32 = arith.constant 0 : i32
    %c0_i32_0 = arith.constant 0 : i32
    %c0_i32_1 = arith.constant 0 : i32
    return %c0_i32, %c0_i32_0 : i32, i32
  }
  func.func @transform_2(%arg0: i32) -> (i32, i32) {
    %c0_i32 = arith.constant 0 : i32
    %c0_i32_0 = arith.constant 0 : i32
    return %arg0, %c0_i32 : i32, i32
  }
  func.func @transform_3(%arg0: i32) -> (i32, i32) {
    %c0_i32 = arith.constant 0 : i32
    %c0_i32_0 = arith.constant 0 : i32
    return %arg0, %c0_i32 : i32, i32
  }
  func.func @transform_4(%arg0: i32) -> (i32, i32) {
    %c0_i32 = arith.constant 0 : i32
    %c0_i32_0 = arith.constant 0 : i32
    return %c0_i32, %arg0 : i32, i32
  }
  func.func @transform_5(%arg0: i32) -> (i32, i32) {
    %c0_i32 = arith.constant 0 : i32
    %c0_i32_0 = arith.constant 0 : i32
    return %arg0, %c0_i32 : i32, i32
  }
  func.func @transform_6(%arg0: i32) -> (i32, i32) {
    %c0_i32 = arith.constant 0 : i32
    %c0_i32_0 = arith.constant 0 : i32
    %c0_i32_1 = arith.constant 0 : i32
    return %c0_i32, %c0_i32_0 : i32, i32
  }
  func.func @transform_7(%arg0: i32) -> (i32, i32) {
    %c0_i32 = arith.constant 0 : i32
    %c0_i32_0 = arith.constant 0 : i32
    %c0_i32_1 = arith.constant 0 : i32
    return %c0_i32, %c0_i32_0 : i32, i32
  }
  func.func @transform_8(%arg0: i32) -> (i32, i32) {
    %c0_i32 = arith.constant 0 : i32
    %c0_i32_0 = arith.constant 0 : i32
    %c0_i32_1 = arith.constant 0 : i32
    return %c0_i32, %c0_i32_0 : i32, i32
  }
  func.func @transform_9(%arg0: i32) -> (i32, i32) {
    %c0_i32 = arith.constant 0 : i32
    %c0_i32_0 = arith.constant 0 : i32
    %c0_i32_1 = arith.constant 0 : i32
    return %c0_i32, %c0_i32_0 : i32, i32
  }
  func.func @transform_10(%arg0: i32) -> (i32, i32) {
    %c0_i32 = arith.constant 0 : i32
    %c0_i32_0 = arith.constant 0 : i32
    %c0_i32_1 = arith.constant 0 : i32
    return %c0_i32, %c0_i32_0 : i32, i32
  }
  func.func @transform_11(%arg0: i32) -> (i32, i32) {
    %c0_i32 = arith.constant 0 : i32
    %c0_i32_0 = arith.constant 0 : i32
    %c0_i32_1 = arith.constant 0 : i32
    return %c0_i32, %c0_i32_0 : i32, i32
  }
  func.func @transform_12(%arg0: i32) -> (i32, i32) {
    %c0_i32 = arith.constant 0 : i32
    %c0_i32_0 = arith.constant 0 : i32
    %c0_i32_1 = arith.constant 0 : i32
    return %c0_i32, %c0_i32_0 : i32, i32
  }
  func.func @transform_13(%arg0: i32) -> (i32, i32) {
    %c0_i32 = arith.constant 0 : i32
    %c0_i32_0 = arith.constant 0 : i32
    %c0_i32_1 = arith.constant 0 : i32
    return %c0_i32, %c0_i32_0 : i32, i32
  }
  func.func @transform_14(%arg0: i32) -> (i32, i32) {
    %c0_i32 = arith.constant 0 : i32
    %c0_i32_0 = arith.constant 0 : i32
    %c0_i32_1 = arith.constant 0 : i32
    return %c0_i32, %c0_i32_0 : i32, i32
  }
  func.func @transform_15(%arg0: i32) -> (i32, i32) {
    %c0_i32 = arith.constant 0 : i32
    %c0_i32_0 = arith.constant 0 : i32
    %c0_i32_1 = arith.constant 0 : i32
    return %c0_i32, %c0_i32_0 : i32, i32
  }
}

</mosaic_0001>

<llo_original>
// kernel: tpu_custom_call.1
$region0: #{tpu_custom_call.1}
  #allocation0 [shape = 'u32[]', space=smem, size = 0x4, offset = 0x4, fixed_abs, tag = 'smem constant byte address 0x4 - core index']
  #allocation1 [shape = 'u32[144,128]{1,0:T(1,128)}', space=vmem, size = 0x12000, scoped, tag = 'internal scratch']
  #allocation2 [shape = 'f32[16,8]{1,0:T(8,128)}', space=vmem, size = 0x2000, scoped, tag = 'scratch operand']
  #allocation3 [shape = 'f32[1,1]{1,0:T(1,128)S(1)}', space=vmem, size = 0x200, scoped, tag = 'scoped memory for tpu_custom_call.1']
  %s0 = inlined_call_operand.vmem [shape: bf16[16,8], index: 0, kind: input, shape index: {}]
  %s1 = inlined_call_operand.vmem [shape: bf16[16,8], index: 1, kind: input, shape index: {}]
  %s2 = inlined_call_operand.vmem [shape: bf16[48,4], index: 2, kind: input, shape index: {}]
  %s3 = inlined_call_operand.vmem [shape: bf16[48,16], index: 3, kind: input, shape index: {}]
  %s4 = inlined_call_operand.vmem [shape: bf16[16,48], index: 4, kind: input, shape index: {}]
  %s5 = inlined_call_operand.vmem [shape: f32[48,1], index: 5, kind: input, shape index: {}]
  %s6 = inlined_call_operand.vmem [shape: bf16[4,8], index: 6, kind: input, shape index: {}]
  %s7 = inlined_call_operand.vmem [shape: bf16[8,32], index: 7, kind: input, shape index: {}]
  %s8 = inlined_call_operand.vmem [shape: bf16[8,32], index: 8, kind: input, shape index: {}]
  %s9 = inlined_call_operand.vmem [shape: f32[1,32], index: 9, kind: input, shape index: {}]
  %s10 = inlined_call_operand.vmem [shape: bf16[2,16], index: 10, kind: input, shape index: {}]
  %s11 = inlined_call_operand.vmem [shape: bf16[32,16], index: 11, kind: input, shape index: {}]
  %s12 = inlined_call_operand.vmem [shape: f32[1,16], index: 12, kind: input, shape index: {}]
  %s13 = inlined_call_operand.vmem [shape: bf16[16,1], index: 13, kind: input, shape index: {}]
  %s14 = inlined_call_operand.<no memory space> [shape: f32[1,1], index: 14, kind: input, shape index: {}]
  %s15 = inlined_call_operand.vmem [shape: f32[2,1], index: 15, kind: output, shape index: {}]
  %s16 = sld [smem:[#allocation0]]
  $region78: #{tpu_custom_call.1} parent=0
    _
  %s18 = ssub.s32 1, %s16
  %s19 = scalar_select 0, %s18, %s16
  %v20 = vstv %s14
  %21 = vst [vmem:[#allocation3] sm:$0x1] %v20
  // Predicated region
  $region2: #{tpu_custom_call.1} parent=0 // pred_check
    _
  $region3: #{tpu_custom_call.1} parent=0 // pred_check_branch
    %23 = sbr.rel (0) target = $region5
  $region4: #{tpu_custom_call.1} parent=0 // pred_region
    _
  $region5: #{tpu_custom_call.1} parent=0 // pred_fallthru
    _
  // Predicated region
  $region6: #{tpu_custom_call.1} parent=0 // pred_check
    _
  $region7: #{tpu_custom_call.1} parent=0 // pred_check_branch
    %25 = sbr.rel (0) target = $region9
  $region8: #{tpu_custom_call.1} parent=0 // pred_region
    _
  $region9: #{tpu_custom_call.1} parent=0 // pred_fallthru
    _
  // Predicated region
  $region10: #{tpu_custom_call.1} parent=0 // pred_check
    _
  $region11: #{tpu_custom_call.1} parent=0 // pred_check_branch
    %27 = sbr.rel (0) target = $region13
  $region12: #{tpu_custom_call.1} parent=0 // pred_region
    _
  $region13: #{tpu_custom_call.1} parent=0 // pred_fallthru
    _
  // Predicated region
  $region14: #{tpu_custom_call.1} parent=0 // pred_check
    _
  $region15: #{tpu_custom_call.1} parent=0 // pred_check_branch
    %29 = sbr.rel (0) target = $region17
  $region16: #{tpu_custom_call.1} parent=0 // pred_region
    _
  $region17: #{tpu_custom_call.1} parent=0 // pred_fallthru
    _
  // Predicated region
  $region18: #{tpu_custom_call.1} parent=0 // pred_check
    _
  $region19: #{tpu_custom_call.1} parent=0 // pred_check_branch
    %31 = sbr.rel (0) target = $region21
  $region20: #{tpu_custom_call.1} parent=0 // pred_region
    _
  $region21: #{tpu_custom_call.1} parent=0 // pred_fallthru
    _
  // Predicated region
  $region22: #{tpu_custom_call.1} parent=0 // pred_check
    _
  $region23: #{tpu_custom_call.1} parent=0 // pred_check_branch
    %33 = sbr.rel (0) target = $region25
  $region24: #{tpu_custom_call.1} parent=0 // pred_region
    _
  $region25: #{tpu_custom_call.1} parent=0 // pred_fallthru
    _
  // Predicated region
  $region26: #{tpu_custom_call.1} parent=0 // pred_check
    _
  $region27: #{tpu_custom_call.1} parent=0 // pred_check_branch
    %35 = sbr.rel (0) target = $region29
  $region28: #{tpu_custom_call.1} parent=0 // pred_region
    _
  $region29: #{tpu_custom_call.1} parent=0 // pred_fallthru
    _
  // Predicated region
  $region30: #{tpu_custom_call.1} parent=0 // pred_check
    _
  $region31: #{tpu_custom_call.1} parent=0 // pred_check_branch
    %37 = sbr.rel (0) target = $region33
  $region32: #{tpu_custom_call.1} parent=0 // pred_region
    _
  $region33: #{tpu_custom_call.1} parent=0 // pred_fallthru
    _
  // Predicated region
  $region34: #{tpu_custom_call.1} parent=0 // pred_check
    _
  $region35: #{tpu_custom_call.1} parent=0 // pred_check_branch
    %39 = sbr.rel (0) target = $region37
  $region36: #{tpu_custom_call.1} parent=0 // pred_region
    _
  $region37: #{tpu_custom_call.1} parent=0 // pred_fallthru
    _
  // Predicated region
  $region38: #{tpu_custom_call.1} parent=0 // pred_check
    _
  $region39: #{tpu_custom_call.1} parent=0 // pred_check_branch
    %41 = sbr.rel (0) target = $region41
  $region40: #{tpu_custom_call.1} parent=0 // pred_region
    _
  $region41: #{tpu_custom_call.1} parent=0 // pred_fallthru
    _
  // Predicated region
  $region42: #{tpu_custom_call.1} parent=0 // pred_check
    _
  $region43: #{tpu_custom_call.1} parent=0 // pred_check_branch
    %43 = sbr.rel (0) target = $region45
  $region44: #{tpu_custom_call.1} parent=0 // pred_region
    _
  $region45: #{tpu_custom_call.1} parent=0 // pred_fallthru
    _
  // Predicated region
  $region46: #{tpu_custom_call.1} parent=0 // pred_check
    _
  $region47: #{tpu_custom_call.1} parent=0 // pred_check_branch
    %45 = sbr.rel (0) target = $region49
  $region48: #{tpu_custom_call.1} parent=0 // pred_region
    _
  $region49: #{tpu_custom_call.1} parent=0 // pred_fallthru
    _
  // Predicated region
  $region50: #{tpu_custom_call.1} parent=0 // pred_check
    _
  $region51: #{tpu_custom_call.1} parent=0 // pred_check_branch
    %47 = sbr.rel (0) target = $region53
  $region52: #{tpu_custom_call.1} parent=0 // pred_region
    _
  $region53: #{tpu_custom_call.1} parent=0 // pred_fallthru
    _
  // Predicated region
  $region54: #{tpu_custom_call.1} parent=0 // pred_check
    _
  $region55: #{tpu_custom_call.1} parent=0 // pred_check_branch
    %49 = sbr.rel (0) target = $region57
  $region56: #{tpu_custom_call.1} parent=0 // pred_region
    _
  $region57: #{tpu_custom_call.1} parent=0 // pred_fallthru
    _
  // Predicated region
  $region58: #{tpu_custom_call.1} parent=0 // pred_check
    _
  $region59: #{tpu_custom_call.1} parent=0 // pred_check_branch
    %51 = sbr.rel (0) target = $region61
  $region60: #{tpu_custom_call.1} parent=0 // pred_region
    _
  $region61: #{tpu_custom_call.1} parent=0 // pred_fallthru
    _
  %p53 = scmp.eq.s32.totalorder 0, 0
  // Predicated region
  $region62: #{tpu_custom_call.1} parent=0 // pred_check
    %p54 = pneg %p53
  $region63: #{tpu_custom_call.1} parent=0 // pred_check_branch
    %56 = sbr.rel (%p54) target = $region65
  $region64: #{tpu_custom_call.1} parent=0 // pred_region
    %vm57 = vcmask 64512
    %58 = vst.msk [vmem:[#allocation2] sm:$0xff] %vm57, 0.0
    %59 = vst.msk [vmem:[#allocation2 + $0x8] sm:$0xff] %vm57, 0.0
  $region65: #{tpu_custom_call.1} parent=0 // pred_fallthru
    _
  %v60 = vld [vmem:[%s3] sm:$0xf]
  %v61 = vld [vmem:[%s3 + $0x4] sm:$0xf]
  %v62 = vld [vmem:[%s3 + $0x8] sm:$0xf]
  %v63 = vld [vmem:[%s3 + $0xc] sm:$0xf]
  %v64 = vld [vmem:[%s3 + $0x10] sm:$0xf]
  %v65 = vld [vmem:[%s3 + $0x14] sm:$0xf]
  %v66 = vld [vmem:[%s1] sm:$0xf]
  %v67 = vld [vmem:[%s1 + $0x4] sm:$0xf]
  %v68 = vld [vmem:[%s2] sm:$0xf]
  %v69 = vld [vmem:[%s2 + $0x4] sm:$0xf]
  %v70 = vld [vmem:[%s2 + $0x8] sm:$0xf]
  %v71 = vld [vmem:[%s2 + $0xc] sm:$0xf]
  %v72 = vld [vmem:[%s2 + $0x10] sm:$0xf]
  %v73 = vld [vmem:[%s2 + $0x14] sm:$0xf]
  %v74 = vld [vmem:[%s6] sm:$0x3]
  %v81 = vunpack.c.l.b16 %v68
  %v82 = vunpack.c.l.b16 %v69
  %v83 = vunpack.c.l.b16 %v70
  %v84 = vunpack.c.l.b16 %v71
  %v85 = vunpack.c.l.b16 %v72
  %v86 = vunpack.c.l.b16 %v73
  %v87 = vpack.c.b16 %v82, %v81
  %v88 = vpack.c.b16 %v84, %v83
  %v89 = vpack.c.b16 %v86, %v85
  %vm90 = vcmask 31744
  %v92 = vsel %vm90, %v87, 0
  %v95 = vsel %vm90, %v88, 0
  %v98 = vsel %vm90, %v89, 0
  %vm100 = vcmask 1041408
  %v102 = vsel %vm100, %v74, 0
  %104 = vmatprep.subr.bf16.mxu0 0
  %105 = vmatpush1.bf16.msra.mxu0 %v102
  %106 = vmatprep.subr.bf16.mxu0 0
  %107 = vmatpush1.bf16.msra.mxu0 0
  %108 = vmatprep.subr.bf16.mxu0 0
  %109 = vmatpush1.bf16.msra.mxu0 0
  %110 = vmatprep.subr.bf16.mxu0 0
  %111 = vmatpush1.bf16.msra.mxu0 0
  %112 = vmatprep.subr.bf16.mxu0 0
  %113 = vmatpush1.bf16.msra.mxu0 0
  %114 = vmatprep.subr.bf16.mxu0 0
  %115 = vmatpush1.bf16.msra.mxu0 0
  %116 = vmatprep.subr.bf16.mxu0 0
  %117 = vmatpush1.bf16.msra.mxu0 0
  %118 = vmatprep.subr.bf16.mxu0 0
  %119 = vmatpush1.bf16.msra.mxu0 0
  %120 = vmatprep.subr.bf16.mxu0 0
  %121 = vmatpush1.bf16.msra.mxu0 0
  %122 = vmatprep.subr.bf16.mxu0 0
  %123 = vmatpush1.bf16.msra.mxu0 0
  %124 = vmatprep.subr.bf16.mxu0 0
  %125 = vmatpush1.bf16.msra.mxu0 0
  %126 = vmatprep.subr.bf16.mxu0 0
  %127 = vmatpush1.bf16.msra.mxu0 0
  %128 = vmatprep.subr.bf16.mxu0 0
  %129 = vmatpush1.bf16.msra.mxu0 0
  %130 = vmatprep.subr.bf16.mxu0 0
  %131 = vmatpush1.bf16.msra.mxu0 0
  %132 = vmatprep.subr.bf16.mxu0 0
  %133 = vmatpush1.bf16.msra.mxu0 0
  %134 = vmatprep.subr.bf16.mxu0 0
  %135 = vmatpush1.bf16.msra.mxu0 0
  %136 = vmatprep.mubr.bf16.mxu0 0
  %137 = vmatmul.mubr.bf16.gmra.mrb[0].mxu0 %v92
  %v138 = vpop.f32.mrb[0].mxu0
  %v139 = vadd.f32 0.0, %v138
  %v140 = vpop.f32.mrb[0].mxu0
  %v141 = vpop.f32.mrb[0].mxu0
  %v142 = vadd.f32 0.0, %v141
  %v143 = vpop.f32.mrb[0].mxu0
  %144 = vmatprep.mubr.bf16.mxu0 0
  %145 = vmatmul.mubr.bf16.gmra.mrb[0].mxu0 %v95
  %v146 = vpop.f32.mrb[0].mxu0
  %v147 = vadd.f32 0.0, %v146
  %v148 = vpop.f32.mrb[0].mxu0
  %v149 = vpop.f32.mrb[0].mxu0
  %v150 = vadd.f32 0.0, %v149
  %v151 = vpop.f32.mrb[0].mxu0
  %152 = vmatprep.mubr.bf16.mxu0 0
  %153 = vmatmul.mubr.bf16.gmra.mrb[0].mxu0 %v98
  %v154 = vpop.f32.mrb[0].mxu0
  %v155 = vadd.f32 0.0, %v154
  %v156 = vpop.f32.mrb[0].mxu0
  %v157 = vpop.f32.mrb[0].mxu0
  %v158 = vadd.f32 0.0, %v157
  %v159 = vpop.f32.mrb[0].mxu0
  %160 = vdwg.mxu0
  %v167 = vunpack.c.l.b16 %v60
  %v168 = vunpack.c.l.b16 %v61
  %v169 = vunpack.c.l.b16 %v62
  %v170 = vunpack.c.l.b16 %v63
  %v171 = vunpack.c.l.b16 %v64
  %v172 = vunpack.c.l.b16 %v65
  %v173 = vpack.c.b16 %v168, %v167
  %v174 = vpack.c.b16 %v170, %v169
  %v175 = vpack.c.b16 %v172, %v171
  %v178 = vunpack.c.l.b16 %v66
  %v179 = vunpack.c.l.b16 %v67
  %v180 = vpack.c.b16 %v179, %v178
  %vm182 = vcmask 130048
  %v184 = vsel %vm182, %v173, 0
  %v187 = vsel %vm182, %v174, 0
  %v190 = vsel %vm182, %v175, 0
  %192 = vmatprep.subr.bf16.mxu0 0
  %193 = vmatpush1.bf16.msra.mxu0 %v180
  %194 = vmatprep.subr.bf16.mxu0 0
  %195 = vmatpush1.bf16.msra.mxu0 0
  %196 = vmatprep.subr.bf16.mxu0 0
  %197 = vmatpush1.bf16.msra.mxu0 0
  %198 = vmatprep.subr.bf16.mxu0 0
  %199 = vmatpush1.bf16.msra.mxu0 0
  %200 = vmatprep.subr.bf16.mxu0 0
  %201 = vmatpush1.bf16.msra.mxu0 0
  %202 = vmatprep.subr.bf16.mxu0 0
  %203 = vmatpush1.bf16.msra.mxu0 0
  %204 = vmatprep.subr.bf16.mxu0 0
  %205 = vmatpush1.bf16.msra.mxu0 0
  %206 = vmatprep.subr.bf16.mxu0 0
  %207 = vmatpush1.bf16.msra.mxu0 0
  %208 = vmatprep.subr.bf16.mxu0 0
  %209 = vmatpush1.bf16.msra.mxu0 0
  %210 = vmatprep.subr.bf16.mxu0 0
  %211 = vmatpush1.bf16.msra.mxu0 0
  %212 = vmatprep.subr.bf16.mxu0 0
  %213 = vmatpush1.bf16.msra.mxu0 0
  %214 = vmatprep.subr.bf16.mxu0 0
  %215 = vmatpush1.bf16.msra.mxu0 0
  %216 = vmatprep.subr.bf16.mxu0 0
  %217 = vmatpush1.bf16.msra.mxu0 0
  %218 = vmatprep.subr.bf16.mxu0 0
  %219 = vmatpush1.bf16.msra.mxu0 0
  %220 = vmatprep.subr.bf16.mxu0 0
  %221 = vmatpush1.bf16.msra.mxu0 0
  %222 = vmatprep.subr.bf16.mxu0 0
  %223 = vmatpush1.bf16.msra.mxu0 0
  %224 = vmatprep.mubr.bf16.mxu0 0
  %225 = vmatmul.mubr.bf16.gmra.mrb[0].mxu0 %v184
  %v226 = vpop.f32.mrb[0].mxu0
  %v227 = vadd.f32 %v139, %v226
  %v228 = vpop.f32.mrb[0].mxu0
  %v229 = vpop.f32.mrb[0].mxu0
  %v230 = vadd.f32 %v142, %v229
  %v231 = vpop.f32.mrb[0].mxu0
  %232 = vmatprep.mubr.bf16.mxu0 0
  %233 = vmatmul.mubr.bf16.gmra.mrb[0].mxu0 %v187
  %v234 = vpop.f32.mrb[0].mxu0
  %v235 = vadd.f32 %v147, %v234
  %v236 = vpop.f32.mrb[0].mxu0
  %v237 = vpop.f32.mrb[0].mxu0
  %v238 = vadd.f32 %v150, %v237
  %v239 = vpop.f32.mrb[0].mxu0
  %240 = vmatprep.mubr.bf16.mxu0 0
  %241 = vmatmul.mubr.bf16.gmra.mrb[0].mxu0 %v190
  %v242 = vpop.f32.mrb[0].mxu0
  %v243 = vadd.f32 %v155, %v242
  %v244 = vpop.f32.mrb[0].mxu0
  %v245 = vpop.f32.mrb[0].mxu0
  %v246 = vadd.f32 %v158, %v245
  %v247 = vpop.f32.mrb[0].mxu0
  %248 = vdwg.mxu0
  %v249 = vld [vmem:[%s5] sm:$0xff]
  %v250 = vld [vmem:[%s5 + $0x8] sm:$0xff]
  %v251 = vld [vmem:[%s5 + $0x10] sm:$0xff]
  %v252 = vld [vmem:[%s5 + $0x18] sm:$0xff]
  %v253 = vld [vmem:[%s5 + $0x20] sm:$0xff]
  %v254 = vld [vmem:[%s5 + $0x28] sm:$0xff]
  %v255 = vmax.f32 %v227, 0.0
  %v256 = vmax.f32 %v230, 0.0
  %v257 = vmax.f32 %v235, 0.0
  %v258 = vmax.f32 %v238, 0.0
  %v259 = vmax.f32 %v243, 0.0
  %v260 = vmax.f32 %v246, 0.0
  %262 = vset.pattern.permute.xlu0 0
  %263 = vperm.xlu0 %262, %v249
  %v264 = vpop.permute.xlu0 %263
  %267 = vset.pattern.permute.xlu0 0
  %268 = vperm.xlu0 %267, %v250
  %v269 = vpop.permute.xlu0 %268
  %272 = vset.pattern.permute.xlu0 0
  %273 = vperm.xlu0 %272, %v251
  %v274 = vpop.permute.xlu0 %273
  %277 = vset.pattern.permute.xlu0 0
  %278 = vperm.xlu0 %277, %v252
  %v279 = vpop.permute.xlu0 %278
  %282 = vset.pattern.permute.xlu0 0
  %283 = vperm.xlu0 %282, %v253
  %v284 = vpop.permute.xlu0 %283
  %287 = vset.pattern.permute.xlu0 0
  %288 = vperm.xlu0 %287, %v254
  %v289 = vpop.permute.xlu0 %288
  %v291 = vmul.f32 %v264, %v255
  %v292 = vmul.f32 %v269, %v256
  %v293 = vmul.f32 %v274, %v257
  %v294 = vmul.f32 %v279, %v258
  %v295 = vmul.f32 %v284, %v259
  %v296 = vmul.f32 %v289, %v260
  %v297 = vld [vmem:[#allocation2] sm:$0xff]
  %v298 = vld [vmem:[#allocation2 + $0x8] sm:$0xff]
  %v299 = vld [vmem:[%s4] sm:$0xf]
  %v300 = vld [vmem:[%s4 + $0x4] sm:$0xf]
  %v301 = vpack.c.bf16 %v292, %v291
  %v302 = vpack.c.bf16 %v294, %v293
  %v303 = vpack.c.bf16 %v296, %v295
  %v306 = vunpack.c.l.b16 %v299
  %v307 = vunpack.c.l.b16 %v300
  %v308 = vpack.c.b16 %v307, %v306
  %vm309 = vcmask 392192
  %v311 = vsel %vm309, %v308, 0
  %313 = vmatprep.subr.bf16.mxu0 0
  %314 = vmatpush1.bf16.msra.mxu0 %v301
  %315 = vmatprep.subr.bf16.mxu0 0
  %316 = vmatpush1.bf16.msra.mxu0 %v302
  %317 = vmatprep.subr.bf16.mxu0 0
  %318 = vmatpush1.bf16.msra.mxu0 %v303
  %319 = vmatprep.subr.bf16.mxu0 0
  %320 = vmatpush1.bf16.msra.mxu0 0
  %321 = vmatprep.subr.bf16.mxu0 0
  %322 = vmatpush1.bf16.msra.mxu0 0
  %323 = vmatprep.subr.bf16.mxu0 0
  %324 = vmatpush1.bf16.msra.mxu0 0
  %325 = vmatprep.subr.bf16.mxu0 0
  %326 = vmatpush1.bf16.msra.mxu0 0
  %327 = vmatprep.subr.bf16.mxu0 0
  %328 = vmatpush1.bf16.msra.mxu0 0
  %329 = vmatprep.subr.bf16.mxu0 0
  %330 = vmatpush1.bf16.msra.mxu0 0
  %331 = vmatprep.subr.bf16.mxu0 0
  %332 = vmatpush1.bf16.msra.mxu0 0
  %333 = vmatprep.subr.bf16.mxu0 0
  %334 = vmatpush1.bf16.msra.mxu0 0
  %335 = vmatprep.subr.bf16.mxu0 0
  %336 = vmatpush1.bf16.msra.mxu0 0
  %337 = vmatprep.subr.bf16.mxu0 0
  %338 = vmatpush1.bf16.msra.mxu0 0
  %339 = vmatprep.subr.bf16.mxu0 0
  %340 = vmatpush1.bf16.msra.mxu0 0
  %341 = vmatprep.subr.bf16.mxu0 0
  %342 = vmatpush1.bf16.msra.mxu0 0
  %343 = vmatprep.subr.bf16.mxu0 0
  %344 = vmatpush1.bf16.msra.mxu0 0
  %345 = vmatprep.mubr.bf16.mxu0 0
  %346 = vmatmul.mubr.bf16.gmra.mrb[0].mxu0 %v311
  %v347 = vpop.f32.mrb[0].mxu0
  %v348 = vadd.f32 0.0, %v347
  %v349 = vpop.f32.mrb[0].mxu0
  %v350 = vpop.f32.mrb[0].mxu0
  %v351 = vadd.f32 0.0, %v350
  %v352 = vpop.f32.mrb[0].mxu0
  %353 = vdwg.mxu0
  %v354 = vadd.f32 %v297, %v348
  %v355 = vadd.f32 %v298, %v351
  %vm356 = vcmask 64512
  %357 = vst.msk [vmem:[#allocation2] sm:$0xff] %vm356, %v354
  %358 = vst.msk [vmem:[#allocation2 + $0x8] sm:$0xff] %vm356, %v355
  // Predicated region
  $region66: #{tpu_custom_call.1} parent=0 // pred_check
    %p359 = pneg %p53
  $region67: #{tpu_custom_call.1} parent=0 // pred_check_branch
    %361 = sbr.rel (%p359) target = $region69
  $region68: #{tpu_custom_call.1} parent=0 // pred_region
    %v362 = vld [vmem:[%s0] sm:$0xf]
    %v363 = vld [vmem:[%s0 + $0x4] sm:$0xf]
    %v364 = vld [vmem:[%s7] sm:$0xf]
    %v365 = vld [vmem:[#allocation2] sm:$0xff]
    %v366 = vld [vmem:[#allocation2 + $0x8] sm:$0xff]
    %v367 = vpack.c.bf16 %v366, %v365
    %v368 = vld [vmem:[%s8] sm:$0xf]
    %v370 = vsel %vm356, %v367, 0
    %vm372 = vcmask 1043456
    %v374 = vsel %vm372, %v368, 0
    %376 = vmatprep.subr.bf16.mxu0 0
    %377 = vmatpush1.bf16.msra.mxu0 %v374
    %378 = vmatprep.subr.bf16.mxu0 0
    %379 = vmatpush1.bf16.msra.mxu0 0
    %380 = vmatprep.subr.bf16.mxu0 0
    %381 = vmatpush1.bf16.msra.mxu0 0
    %382 = vmatprep.subr.bf16.mxu0 0
    %383 = vmatpush1.bf16.msra.mxu0 0
    %384 = vmatprep.subr.bf16.mxu0 0
    %385 = vmatpush1.bf16.msra.mxu0 0
    %386 = vmatprep.subr.bf16.mxu0 0
    %387 = vmatpush1.bf16.msra.mxu0 0
    %388 = vmatprep.subr.bf16.mxu0 0
    %389 = vmatpush1.bf16.msra.mxu0 0
    %390 = vmatprep.subr.bf16.mxu0 0
    %391 = vmatpush1.bf16.msra.mxu0 0
    %392 = vmatprep.subr.bf16.mxu0 0
    %393 = vmatpush1.bf16.msra.mxu0 0
    %394 = vmatprep.subr.bf16.mxu0 0
    %395 = vmatpush1.bf16.msra.mxu0 0
    %396 = vmatprep.subr.bf16.mxu0 0
    %397 = vmatpush1.bf16.msra.mxu0 0
    %398 = vmatprep.subr.bf16.mxu0 0
    %399 = vmatpush1.bf16.msra.mxu0 0
    %400 = vmatprep.subr.bf16.mxu0 0
    %401 = vmatpush1.bf16.msra.mxu0 0
    %402 = vmatprep.subr.bf16.mxu0 0
    %403 = vmatpush1.bf16.msra.mxu0 0
    %404 = vmatprep.subr.bf16.mxu0 0
    %405 = vmatpush1.bf16.msra.mxu0 0
    %406 = vmatprep.subr.bf16.mxu0 0
    %407 = vmatpush1.bf16.msra.mxu0 0
    %408 = vmatprep.mubr.bf16.mxu0 0
    %409 = vmatmul.mubr.bf16.gmra.mrb[0].mxu0 %v370
    %v410 = vpop.f32.mrb[0].mxu0
    %v411 = vadd.f32 0.0, %v410
    %v412 = vpop.f32.mrb[0].mxu0
    %v413 = vpop.f32.mrb[0].mxu0
    %v414 = vadd.f32 0.0, %v413
    %v415 = vpop.f32.mrb[0].mxu0
    %416 = vdwg.mxu0
    %v419 = vunpack.c.l.b16 %v362
    %v420 = vunpack.c.l.b16 %v363
    %v421 = vpack.c.b16 %v420, %v419
    %v423 = vsel %vm356, %v421, 0
    %v426 = vsel %vm372, %v364, 0
    %428 = vmatprep.subr.bf16.mxu0 0
    %429 = vmatpush1.bf16.msra.mxu0 %v426
    %430 = vmatprep.subr.bf16.mxu0 0
    %431 = vmatpush1.bf16.msra.mxu0 0
    %432 = vmatprep.subr.bf16.mxu0 0
    %433 = vmatpush1.bf16.msra.mxu0 0
    %434 = vmatprep.subr.bf16.mxu0 0
    %435 = vmatpush1.bf16.msra.mxu0 0
    %436 = vmatprep.subr.bf16.mxu0 0
    %437 = vmatpush1.bf16.msra.mxu0 0
    %438 = vmatprep.subr.bf16.mxu0 0
    %439 = vmatpush1.bf16.msra.mxu0 0
    %440 = vmatprep.subr.bf16.mxu0 0
    %441 = vmatpush1.bf16.msra.mxu0 0
    %442 = vmatprep.subr.bf16.mxu0 0
    %443 = vmatpush1.bf16.msra.mxu0 0
    %444 = vmatprep.subr.bf16.mxu0 0
    %445 = vmatpush1.bf16.msra.mxu0 0
    %446 = vmatprep.subr.bf16.mxu0 0
    %447 = vmatpush1.bf16.msra.mxu0 0
    %448 = vmatprep.subr.bf16.mxu0 0
    %449 = vmatpush1.bf16.msra.mxu0 0
    %450 = vmatprep.subr.bf16.mxu0 0
    %451 = vmatpush1.bf16.msra.mxu0 0
    %452 = vmatprep.subr.bf16.mxu0 0
    %453 = vmatpush1.bf16.msra.mxu0 0
    %454 = vmatprep.subr.bf16.mxu0 0
    %455 = vmatpush1.bf16.msra.mxu0 0
    %456 = vmatprep.subr.bf16.mxu0 0
    %457 = vmatpush1.bf16.msra.mxu0 0
    %458 = vmatprep.subr.bf16.mxu0 0
    %459 = vmatpush1.bf16.msra.mxu0 0
    %460 = vmatprep.mubr.bf16.mxu0 0
    %461 = vmatmul.mubr.bf16.gmra.mrb[0].mxu0 %v423
    %v462 = vpop.f32.mrb[0].mxu0
    %v463 = vadd.f32 %v411, %v462
    %v464 = vpop.f32.mrb[0].mxu0
    %v465 = vpop.f32.mrb[0].mxu0
    %v466 = vadd.f32 %v414, %v465
    %v467 = vpop.f32.mrb[0].mxu0
    %468 = vdwg.mxu0
    %v469 = vld [vmem:[%s9] sm:$0x1]
    %v471 = vlaneseq
    %v472 = vshrl.u32 %v471, 7
    %v473 = vsub.s32 0, %v472
    %v474 = vrot.slane %v469, %v473
    %v476 = vadd.f32 %v463, %v474
    %v477 = vadd.f32 %v466, %v474
    %v478 = vmax.f32 %v476, 0.0
    %v479 = vmax.f32 %v477, 0.0
    %v480 = vld [vmem:[%s10] sm:$0x1]
    %v481 = vpack.c.bf16 %v479, %v478
    %v483 = vsel %vm182, %v480, 0
    %485 = vmatprep.subr.bf16.mxu0 0
    %486 = vmatpush1.bf16.msra.mxu0 %v481
    %487 = vmatprep.subr.bf16.mxu0 0
    %488 = vmatpush1.bf16.msra.mxu0 0
    %489 = vmatprep.subr.bf16.mxu0 0
    %490 = vmatpush1.bf16.msra.mxu0 0
    %491 = vmatprep.subr.bf16.mxu0 0
    %492 = vmatpush1.bf16.msra.mxu0 0
    %493 = vmatprep.subr.bf16.mxu0 0
    %494 = vmatpush1.bf16.msra.mxu0 0
    %495 = vmatprep.subr.bf16.mxu0 0
    %496 = vmatpush1.bf16.msra.mxu0 0
    %497 = vmatprep.subr.bf16.mxu0 0
    %498 = vmatpush1.bf16.msra.mxu0 0
    %499 = vmatprep.subr.bf16.mxu0 0
    %500 = vmatpush1.bf16.msra.mxu0 0
    %501 = vmatprep.subr.bf16.mxu0 0
    %502 = vmatpush1.bf16.msra.mxu0 0
    %503 = vmatprep.subr.bf16.mxu0 0
    %504 = vmatpush1.bf16.msra.mxu0 0
    %505 = vmatprep.subr.bf16.mxu0 0
    %506 = vmatpush1.bf16.msra.mxu0 0
    %507 = vmatprep.subr.bf16.mxu0 0
    %508 = vmatpush1.bf16.msra.mxu0 0
    %509 = vmatprep.subr.bf16.mxu0 0
    %510 = vmatpush1.bf16.msra.mxu0 0
    %511 = vmatprep.subr.bf16.mxu0 0
    %512 = vmatpush1.bf16.msra.mxu0 0
    %513 = vmatprep.subr.bf16.mxu0 0
    %514 = vmatpush1.bf16.msra.mxu0 0
    %515 = vmatprep.subr.bf16.mxu0 0
    %516 = vmatpush1.bf16.msra.mxu0 0
    %517 = vmatprep.mubr.bf16.mxu0 0
    %518 = vmatmul.mubr.bf16.gmra.mrb[0].mxu0 %v483
    %v519 = vpop.f32.mrb[0].mxu0
    %v520 = vadd.f32 0.0, %v519
    %v521 = vpop.f32.mrb[0].mxu0
    %v522 = vpop.f32.mrb[0].mxu0
    %v523 = vpop.f32.mrb[0].mxu0
    %524 = vdwg.mxu0
    %v525 = vpack.c.bf16 %v520, %v520
    %v526 = vld [vmem:[%s11] sm:$0xf]
    %v527 = vld [vmem:[%s11 + $0x4] sm:$0xf]
    %v528 = vld [vmem:[%s11 + $0x8] sm:$0xf]
    %v529 = vld [vmem:[%s11 + $0xc] sm:$0xf]
    %v530 = vld [vmem:[%s12] sm:$0x1]
    %v532 = vlaneseq
    %v533 = vshrl.u32 %v532, 7
    %v534 = vsub.s32 0, %v533
    %v535 = vrot.slane %v530, %v534
    %v541 = vunpack.c.l.b16 %v526
    %v542 = vunpack.c.l.b16 %v527
    %v543 = vunpack.c.l.b16 %v528
    %v544 = vunpack.c.l.b16 %v529
    %v545 = vpack.c.b16 %v542, %v541
    %v546 = vpack.c.b16 %v544, %v543
    %vm549 = vcmask 261120
    %v551 = vsel %vm549, %v525, 0
    %553 = vmatprep.subr.bf16.mxu0 0
    %554 = vmatpush1.bf16.msra.mxu0 %v545
    %555 = vmatprep.subr.bf16.mxu0 0
    %556 = vmatpush1.bf16.msra.mxu0 %v546
    %557 = vmatprep.subr.bf16.mxu0 0
    %558 = vmatpush1.bf16.msra.mxu0 0
    %559 = vmatprep.subr.bf16.mxu0 0
    %560 = vmatpush1.bf16.msra.mxu0 0
    %561 = vmatprep.subr.bf16.mxu0 0
    %562 = vmatpush1.bf16.msra.mxu0 0
    %563 = vmatprep.subr.bf16.mxu0 0
    %564 = vmatpush1.bf16.msra.mxu0 0
    %565 = vmatprep.subr.bf16.mxu0 0
    %566 = vmatpush1.bf16.msra.mxu0 0
    %567 = vmatprep.subr.bf16.mxu0 0
    %568 = vmatpush1.bf16.msra.mxu0 0
    %569 = vmatprep.subr.bf16.mxu0 0
    %570 = vmatpush1.bf16.msra.mxu0 0
    %571 = vmatprep.subr.bf16.mxu0 0
    %572 = vmatpush1.bf16.msra.mxu0 0
    %573 = vmatprep.subr.bf16.mxu0 0
    %574 = vmatpush1.bf16.msra.mxu0 0
    %575 = vmatprep.subr.bf16.mxu0 0
    %576 = vmatpush1.bf16.msra.mxu0 0
    %577 = vmatprep.subr.bf16.mxu0 0
    %578 = vmatpush1.bf16.msra.mxu0 0
    %579 = vmatprep.subr.bf16.mxu0 0
    %580 = vmatpush1.bf16.msra.mxu0 0
    %581 = vmatprep.subr.bf16.mxu0 0
    %582 = vmatpush1.bf16.msra.mxu0 0
    %583 = vmatprep.subr.bf16.mxu0 0
    %584 = vmatpush1.bf16.msra.mxu0 0
    %585 = vmatprep.mubr.bf16.mxu0 0
    %586 = vmatmul.mubr.bf16.gmra.mrb[0].mxu0 %v551
    %v587 = vpop.f32.mrb[0].mxu0
    %v588 = vadd.f32 %v535, %v587
    %v589 = vpop.f32.mrb[0].mxu0
    %v590 = vpop.f32.mrb[0].mxu0
    %v591 = vpop.f32.mrb[0].mxu0
    %592 = vdwg.mxu0
    %v593 = vmax.f32 %v588, 0.0
    %v594 = vpack.c.bf16 %v593, %v593
    %v595 = vld [vmem:[%s13] sm:$0xf]
    %v596 = vld [vmem:[%s13 + $0x4] sm:$0xf]
    %v597 = vld [vmem:[#allocation3] sm:$0x1]
    %v599 = vlaneseq
    %v600 = vshrl.u32 %v599, 7
    %v601 = vsub.s32 0, %v600
    %v602 = vrot.slane %v597, %v601
    %v606 = vunpack.c.l.b16 %v595
    %v607 = vunpack.c.l.b16 %v596
    %v608 = vpack.c.b16 %v607, %v606
    %v611 = vsel %vm182, %v594, 0
    %613 = vmatprep.subr.bf16.mxu0 0
    %614 = vmatpush1.bf16.msra.mxu0 %v608
    %615 = vmatprep.subr.bf16.mxu0 0
    %616 = vmatpush1.bf16.msra.mxu0 0
    %617 = vmatprep.subr.bf16.mxu0 0
    %618 = vmatpush1.bf16.msra.mxu0 0
    %619 = vmatprep.subr.bf16.mxu0 0
    %620 = vmatpush1.bf16.msra.mxu0 0
    %621 = vmatprep.subr.bf16.mxu0 0
    %622 = vmatpush1.bf16.msra.mxu0 0
    %623 = vmatprep.subr.bf16.mxu0 0
    %624 = vmatpush1.bf16.msra.mxu0 0
    %625 = vmatprep.subr.bf16.mxu0 0
    %626 = vmatpush1.bf16.msra.mxu0 0
    %627 = vmatprep.subr.bf16.mxu0 0
    %628 = vmatpush1.bf16.msra.mxu0 0
    %629 = vmatprep.subr.bf16.mxu0 0
    %630 = vmatpush1.bf16.msra.mxu0 0
    %631 = vmatprep.subr.bf16.mxu0 0
    %632 = vmatpush1.bf16.msra.mxu0 0
    %633 = vmatprep.subr.bf16.mxu0 0
    %634 = vmatpush1.bf16.msra.mxu0 0
    %635 = vmatprep.subr.bf16.mxu0 0
    %636 = vmatpush1.bf16.msra.mxu0 0
    %637 = vmatprep.subr.bf16.mxu0 0
    %638 = vmatpush1.bf16.msra.mxu0 0
    %639 = vmatprep.subr.bf16.mxu0 0
    %640 = vmatpush1.bf16.msra.mxu0 0
    %641 = vmatprep.subr.bf16.mxu0 0
    %642 = vmatpush1.bf16.msra.mxu0 0
    %643 = vmatprep.subr.bf16.mxu0 0
    %644 = vmatpush1.bf16.msra.mxu0 0
    %645 = vmatprep.mubr.bf16.mxu0 0
    %646 = vmatmul.mubr.bf16.gmra.mrb[0].mxu0 %v611
    %v647 = vpop.f32.mrb[0].mxu0
    %v648 = vadd.f32 %v602, %v647
    %v649 = vpop.f32.mrb[0].mxu0
    %v650 = vpop.f32.mrb[0].mxu0
    %v651 = vpop.f32.mrb[0].mxu0
    %652 = vdwg.mxu0
    %vm653 = vcmask 1024
    %654 = vst.msk [vmem:[%s15] sm:$0x3] %vm653, %v648
  $region69: #{tpu_custom_call.1} parent=0 // pred_fallthru
    _
  // Predicated region
  $region70: #{tpu_custom_call.1} parent=0 // pred_check
    _
  $region71: #{tpu_custom_call.1} parent=0 // pred_check_branch
    %656 = sbr.rel (0) target = $region73
  $region72: #{tpu_custom_call.1} parent=0 // pred_region
    _
  $region73: #{tpu_custom_call.1} parent=0 // pred_fallthru
    _
  // Predicated region
  $region74: #{tpu_custom_call.1} parent=0 // pred_check
    _
  $region75: #{tpu_custom_call.1} parent=0 // pred_check_branch
    %658 = sbr.rel (0) target = $region77
  $region76: #{tpu_custom_call.1} parent=0 // pred_region
    _
  $region77: #{tpu_custom_call.1} parent=0 // pred_fallthru
    _

</llo_original>
